<compile_context>
chip_gen: v7x
topology: tpu7x:2x2x1
jax: 0.10.0
libtpu: 0.0.40
codegen_flags: <defaults>
</compile_context>

<pallas_src>
import functools

import jax
import jax.numpy as jnp
from jax.experimental import pallas as pl
from jax.experimental.pallas import tpu as pltpu


def _round_up(x, m):
    return ((x + m - 1) // m) * m


def _patch_embed_kernel(x_ref, w_ref, p_ref, o_ref, *, eps, e_real, e_pad):
    # x_ref: (TN, K)      bf16 flattened patches
    # w_ref: (K, E_pad)   bf16 projection weight (zero-padded columns)
    # p_ref: (8, E_pad)   f32 params: row 0 = conv bias, 1 = LN gamma, 2 = LN beta
    # o_ref: (TN, E_pad)
    y = jnp.dot(x_ref[...], w_ref[...], preferred_element_type=jnp.float32)

    params = p_ref[...]
    bias = params[0:1, :]
    gamma = params[1:2, :]
    beta = params[2:3, :]
    y = y + bias  # padded columns stay exactly 0 (zero weight cols + zero bias)

    # LayerNorm over the real embed dim (biased variance, eps inside rsqrt) in f32.
    inv_e = jnp.float32(1.0 / e_real)
    mean = jnp.sum(y, axis=-1, keepdims=True) * inv_e
    if e_real == e_pad:
        centered = y - mean
    else:
        col = jax.lax.broadcasted_iota(jnp.int32, (1, e_pad), 1)
        centered = jnp.where(col < e_real, y - mean, 0.0)
    var = jnp.sum(centered * centered, axis=-1, keepdims=True) * inv_e
    normed = centered * jax.lax.rsqrt(var + eps)
    o_ref[...] = (normed * gamma + beta).astype(o_ref.dtype)


def _choose_row_tile(n, k, e_pad, out_bytes, vmem_budget):
    # Inputs/outputs are double-buffered by the pipeline; weight/params budgeted 2x too.
    fixed = 2 * k * e_pad * 2 + 2 * 8 * e_pad * 4
    per_row = 2 * (k * 2 + e_pad * out_bytes)
    fit = max((vmem_budget - fixed) // per_row, 8)
    tn = min(1024, int(fit), _round_up(n, 8))
    return max(8, (tn // 8) * 8)


def patch_embed(inputs, conv_w, conv_b, ln_gamma, ln_beta, *,
                patch_size, eps=1e-6, row_tile=None, out_dtype=jnp.float32):
    """inputs: (B, C, H, W) NCHW. Returns (B, num_patches, embed_dim)."""
    B, C, H, W = inputs.shape
    P = patch_size
    assert H % P == 0 and W % P == 0, "image size must be divisible by patch size"
    gh, gw = H // P, W // P
    num_patches = gh * gw
    E = conv_w.shape[0]
    K = C * P * P
    E_pad = _round_up(E, 128)

    # --- glue (plain JAX): patch extraction in bf16 -> (B*num_patches, C*P*P)
    x = inputs.astype(jnp.bfloat16).reshape(B, C, gh, P, gw, P)
    x = jnp.transpose(x, (0, 2, 4, 1, 3, 5))            # (B, gh, gw, C, P, P)
    x_patches = x.reshape(B * num_patches, K)

    # conv weight (E, C, P, P) -> (K, E_pad) bf16, same (c, ph, pw) ordering as patches
    w_mat = jnp.transpose(conv_w.reshape(E, K)).astype(jnp.bfloat16)
    if E_pad != E:
        w_mat = jnp.pad(w_mat, ((0, 0), (0, E_pad - E)))

    # bias / gamma / beta stacked into a single aligned (8, E_pad) f32 slab
    params = jnp.zeros((8, E_pad), jnp.float32)
    params = params.at[0, :E].set(conv_b.astype(jnp.float32))
    params = params.at[1, :E].set(ln_gamma.astype(jnp.float32))
    params = params.at[2, :E].set(ln_beta.astype(jnp.float32))

    N = B * num_patches
    out_bytes = jnp.dtype(out_dtype).itemsize

    if row_tile is None:
        TN = _choose_row_tile(N, K, E_pad, out_bytes, vmem_budget=48 << 20)
    else:
        assert row_tile % 8 == 0, "row_tile must be a multiple of 8"
        TN = row_tile

    nblocks = pl.cdiv(N, TN)
    if nblocks > 1 and nblocks % 2 == 1:
        nblocks += 1  # even block count so both v7x TensorCores get work
    Npad = nblocks * TN
    if Npad != N:
        x_patches = jnp.pad(x_patches, ((0, Npad - N), (0, 0)))

    kernel = functools.partial(_patch_embed_kernel, eps=eps, e_real=E, e_pad=E_pad)

    vmem_needed = (2 * TN * K * 2                 # double-buffered x tiles (bf16)
                   + 2 * TN * E_pad * out_bytes   # double-buffered out tiles
                   + 2 * K * E_pad * 2            # weight
                   + 2 * 8 * E_pad * 4            # params
                   + (2 << 20))                   # headroom
    vmem_limit = int(min(max(vmem_needed, 32 << 20), 120 << 20))

    cost = pl.CostEstimate(
        flops=2 * Npad * K * E_pad,
        bytes_accessed=(Npad * K * 2 + K * E_pad * 2
                        + Npad * E_pad * out_bytes + 8 * E_pad * 4),
        transcendentals=0,
    )

    out_flat = pl.pallas_call(
        kernel,
        out_shape=jax.ShapeDtypeStruct((Npad, E_pad), out_dtype),
        grid_spec=pltpu.PrefetchScalarGridSpec(
            num_scalar_prefetch=0,
            grid=(nblocks,),
            in_specs=[
                pl.BlockSpec((TN, K), lambda i: (i, 0)),
                pl.BlockSpec((K, E_pad), lambda i: (0, 0)),
                pl.BlockSpec((8, E_pad), lambda i: (0, 0)),
            ],
            out_specs=pl.BlockSpec((TN, E_pad), lambda i: (i, 0)),
        ),
        compiler_params=pltpu.CompilerParams(
            dimension_semantics=("parallel",),
            vmem_limit_bytes=vmem_limit),
        cost_estimate=cost,
    )(x_patches, w_mat, params)

    return out_flat[:N, :E].reshape(B, num_patches, E)


def _reference(x, conv_w, conv_b, ln_gamma, ln_beta, patch_size, eps=1e-6):
    """Pure-JAX f32 reference matching the PyTorch module."""
    B, C, H, W = x.shape
    P = patch_size
    gh, gw = H // P, W // P
    E = conv_w.shape[0]
    K = C * P * P
    xp = x.reshape(B, C, gh, P, gw, P).transpose(0, 2, 4, 1, 3, 5).reshape(B * gh * gw, K)
    y = xp.astype(jnp.float32) @ conv_w.reshape(E, K).T.astype(jnp.float32) + conv_b
    mean = y.mean(-1, keepdims=True)
    var = ((y - mean) ** 2).mean(-1, keepdims=True)
    out = (y - mean) / jnp.sqrt(var + eps) * ln_gamma + ln_beta
    return out.reshape(B, gh * gw, E)


if __name__ == "__main__":
    # Small shapes consistent with the module's forward:
    # img_size=16, patch_size=8, in_c=4, embed_dim=32 -> grid 2x2, num_patches=4
    B, C, H, W = 2, 4, 16, 16
    P = 8
    E = 32

    key = jax.random.PRNGKey(0)
    k_x, k_w, k_b, k_g, k_beta = jax.random.split(key, 5)

    x = jax.random.normal(k_x, (B, C, H, W), dtype=jnp.float32)
    conv_w = jax.random.normal(k_w, (E, C, P, P), dtype=jnp.float32) * 0.02
    conv_b = jax.random.normal(k_b, (E,), dtype=jnp.float32) * 0.02
    ln_gamma = jnp.ones((E,), dtype=jnp.float32) + 0.01 * jax.random.normal(k_g, (E,))
    ln_beta = 0.01 * jax.random.normal(k_beta, (E,))

    out = patch_embed(x, conv_w, conv_b, ln_gamma, ln_beta, patch_size=P)
    out = jax.block_until_ready(out)

    assert out.shape == (B, (H // P) * (W // P), E), out.shape

    ref = _reference(x, conv_w, conv_b, ln_gamma, ln_beta, patch_size=P)
    assert bool(jnp.all(jnp.isfinite(out)))
    # bf16 matmul with f32 accumulation -> loose tolerance vs f32 reference.
    assert bool(jnp.allclose(out.astype(jnp.float32), ref, atol=5e-2, rtol=5e-2)), (
        "max abs err %f" % float(jnp.max(jnp.abs(out.astype(jnp.float32) - ref))))

    print("KERNEL_OK")
</pallas_src>

<mosaic_0001>
module attributes {stable_mosaic.version = 11 : i64} {
  func.func @_patch_embed_kernel(%arg0: i32, %arg1: memref<8x256xbf16, #tpu.memory_space<vmem>>, %arg2: memref<256x128xbf16, #tpu.memory_space<vmem>>, %arg3: memref<8x128xf32, #tpu.memory_space<vmem>>, %arg4: memref<8x128xf32, #tpu.memory_space<vmem>>) attributes {dimension_semantics = [#tpu.dimension_semantics<parallel>], iteration_bounds = array<i64: 1>, scalar_prefetch = 0 : i64, scratch_operands = 0 : i64, tpu.core_type = #tpu.core_type<tc>, window_params = [{transform_indices = @transform_0, window_bounds = array<i64: 8, 256>}, {pipeline_mode = #tpu.pipeline_mode<synchronous>, transform_indices = @transform_1, window_bounds = array<i64: 256, 128>}, {pipeline_mode = #tpu.pipeline_mode<synchronous>, transform_indices = @transform_2, window_bounds = array<i64: 8, 128>}, {transform_indices = @transform_3, window_bounds = array<i64: 8, 128>}]} {
    %c0 = arith.constant 0 : index
    %c0_0 = arith.constant 0 : index
    %0 = vector.load %arg1[%c0, %c0_0] : memref<8x256xbf16, #tpu.memory_space<vmem>>, vector<8x256xbf16>
    %c0_1 = arith.constant 0 : index
    %c0_2 = arith.constant 0 : index
    %1 = vector.load %arg2[%c0_1, %c0_2] : memref<256x128xbf16, #tpu.memory_space<vmem>>, vector<256x128xbf16>
    %cst = arith.constant dense<0.000000e+00> : vector<8x128xf32>
    %2 = tpu.matmul %0, %1, %cst {dimension_numbers = #tpu.dot_dimension_numbers<[1], [0], [0], [1], [0, 0, 1, 1], [], []>} : vector<8x256xbf16>, vector<256x128xbf16>, vector<8x128xf32> -> vector<8x128xf32>
    %c0_3 = arith.constant 0 : index
    %c0_4 = arith.constant 0 : index
    %3 = vector.load %arg3[%c0_3, %c0_4] : memref<8x128xf32, #tpu.memory_space<vmem>>, vector<8x128xf32>
    %4 = vector.extract_strided_slice %3 {offsets = [0, 0], sizes = [1, 128], strides = [1, 1]} : vector<8x128xf32> to vector<1x128xf32>
    %5 = vector.extract_strided_slice %3 {offsets = [1, 0], sizes = [1, 128], strides = [1, 1]} : vector<8x128xf32> to vector<1x128xf32>
    %6 = vector.extract_strided_slice %3 {offsets = [2, 0], sizes = [1, 128], strides = [1, 1]} : vector<8x128xf32> to vector<1x128xf32>
    %7 = vector.broadcast %4 : vector<1x128xf32> to vector<8x128xf32>
    %8 = arith.addf %2, %7 : vector<8x128xf32>
    %cst_5 = arith.constant dense<0.000000e+00> : vector<8xf32>
    %9 = vector.multi_reduction <add>, %8, %cst_5 [1] : vector<8x128xf32> to vector<8xf32>
    %10 = vector.shape_cast %9 : vector<8xf32> to vector<8x1xf32>
    %cst_6 = arith.constant 3.125000e-02 : f32
    %11 = vector.broadcast %cst_6 : f32 to vector<8x1xf32>
    %12 = arith.mulf %10, %11 : vector<8x1xf32>
    %13 = tpu.iota {dimensions = array<i32: 1>} : vector<1x128xi32>
    %c32_i32 = arith.constant 32 : i32
    %14 = vector.broadcast %c32_i32 : i32 to vector<1x128xi32>
    %15 = arith.cmpi slt, %13, %14 : vector<1x128xi32>
    %16 = vector.broadcast %12 : vector<8x1xf32> to vector<8x128xf32>
    %17 = arith.subf %8, %16 : vector<8x128xf32>
    %cst_7 = arith.constant 0.000000e+00 : f32
    %18 = vector.shape_cast %15 : vector<1x128xi1> to vector<1x128xi1>
    %19 = vector.broadcast %18 : vector<1x128xi1> to vector<8x128xi1>
    %20 = vector.broadcast %cst_7 : f32 to vector<8x128xf32>
    %21 = arith.select %19, %17, %20 : vector<8x128xi1>, vector<8x128xf32>
    %22 = arith.mulf %21, %21 : vector<8x128xf32>
    %cst_8 = arith.constant dense<0.000000e+00> : vector<8xf32>
    %23 = vector.multi_reduction <add>, %22, %cst_8 [1] : vector<8x128xf32> to vector<8xf32>
    %24 = vector.shape_cast %23 : vector<8xf32> to vector<8x1xf32>
    %cst_9 = arith.constant 3.125000e-02 : f32
    %25 = vector.broadcast %cst_9 : f32 to vector<8x1xf32>
    %26 = arith.mulf %24, %25 : vector<8x1xf32>
    %cst_10 = arith.constant 9.99999997E-7 : f32
    %27 = vector.broadcast %cst_10 : f32 to vector<8x1xf32>
    %28 = arith.addf %26, %27 : vector<8x1xf32>
    %29 = math.rsqrt %28 : vector<8x1xf32>
    %30 = vector.broadcast %29 : vector<8x1xf32> to vector<8x128xf32>
    %31 = arith.mulf %21, %30 : vector<8x128xf32>
    %32 = vector.broadcast %5 : vector<1x128xf32> to vector<8x128xf32>
    %33 = arith.mulf %31, %32 : vector<8x128xf32>
    %34 = vector.broadcast %6 : vector<1x128xf32> to vector<8x128xf32>
    %35 = arith.addf %33, %34 : vector<8x128xf32>
    %c0_11 = arith.constant 0 : index
    %c0_12 = arith.constant 0 : index
    %36 = vector.load %arg4[%c0_11, %c0_12] : memref<8x128xf32, #tpu.memory_space<vmem>>, vector<8x128xf32>
    tpu.vector_store %arg4[%c0_11, %c0_12], %35 {strides = array<i32>} : memref<8x128xf32, #tpu.memory_space<vmem>>, vector<8x128xf32>,
    return
  }
  func.func @transform_0(%arg0: i32) -> (i32, i32) {
    %c0_i32 = arith.constant 0 : i32
    %c0_i32_0 = arith.constant 0 : i32
    return %arg0, %c0_i32 : i32, i32
  }
  func.func @transform_1(%arg0: i32) -> (i32, i32) {
    %c0_i32 = arith.constant 0 : i32
    %c0_i32_0 = arith.constant 0 : i32
    %c0_i32_1 = arith.constant 0 : i32
    return %c0_i32, %c0_i32_0 : i32, i32
  }
  func.func @transform_2(%arg0: i32) -> (i32, i32) {
    %c0_i32 = arith.constant 0 : i32
    %c0_i32_0 = arith.constant 0 : i32
    %c0_i32_1 = arith.constant 0 : i32
    return %c0_i32, %c0_i32_0 : i32, i32
  }
  func.func @transform_3(%arg0: i32) -> (i32, i32) {
    %c0_i32 = arith.constant 0 : i32
    %c0_i32_0 = arith.constant 0 : i32
    return %arg0, %c0_i32 : i32, i32
  }
}

</mosaic_0001>

<llo_original>
// kernel: tpu_custom_call.1
$region0: #{tpu_custom_call.1}
  #allocation0 [shape = 'u32[]', space=smem, size = 0x4, offset = 0x4, fixed_abs, tag = 'smem constant byte address 0x4 - core index']
  #allocation1 [shape = 'u32[144,128]{1,0:T(1,128)}', space=vmem, size = 0x12000, scoped, tag = 'internal scratch']
  %s0 = inlined_call_operand.hbm [shape: bf16[8,256], index: 0, kind: input, shape index: {}]
  %s1 = inlined_call_operand.hbm [shape: bf16[256,128], index: 1, kind: input, shape index: {}]
  %s2 = inlined_call_operand.hbm [shape: f32[8,128], index: 2, kind: input, shape index: {}]
  %s3 = inlined_call_operand.hbm [shape: f32[8,128], index: 3, kind: output, shape index: {}]
  %s4 = sld [smem:[#allocation0]]
  $region34: #{tpu_custom_call.1} parent=0
    _
  %s6 = ssub.s32 1, %s4
  %s7 = scalar_select 0, %s6, %s4
  $region1: #{tpu_custom_call.1} parent=0
    #allocation2 [shape = 'u8[4096]{0}', space=vmem, size = 0x1000, scoped, tag = 'input window, operand 0, single buffered']
    #allocation3 [shape = 's32[1]{0}', space=sflag, size = 0x4, scoped, tag = 'scoped memory for tpu_custom_call.1']
    #allocation4 [shape = 's32[1]{0}', space=sflag, size = 0x4, scoped, tag = 'scoped memory for tpu_custom_call.1']
    #allocation5 [shape = 'u8[65536]{0}', space=vmem, size = 0x10000, scoped, tag = 'input window, operand 1, single buffered']
    #allocation6 [shape = 's32[1]{0}', space=sflag, size = 0x4, scoped, tag = 'scoped memory for tpu_custom_call.1']
    #allocation7 [shape = 'u8[4096]{0}', space=vmem, size = 0x1000, scoped, tag = 'input window, operand 2, single buffered']
    #allocation8 [shape = 'u8[4096]{0}', space=vmem, size = 0x1000, scoped, tag = 'output window, operand 0, single buffered']
    %8 = vsyncpa [#allocation3], 0
    %9 = vsyncpa [#allocation6], 0
    %10 = vsyncpa [#allocation4], 0
    // Predicated region
    $region2: #{tpu_custom_call.1} parent=1 // pred_check
      _
    $region3: #{tpu_custom_call.1} parent=1 // pred_check_branch
      %12 = sbr.rel (0) target = $region5
    $region4: #{tpu_custom_call.1} parent=1 // pred_region
      %s14 = ssub.s32 128, 128
      %15 = vsyncadd [#allocation3], %s14
      %s17 = sshll.u32 [#allocation2], 4
      %s18 = int_to_ptr.vmem [resolvable:$true] %s17
      %20 = dma.hbm_to_vmem [thread:$0]  %s0, 128, %s18, [#allocation3]
    $region5: #{tpu_custom_call.1} parent=1 // pred_fallthru
      _
    // Predicated region
    $region6: #{tpu_custom_call.1} parent=1 // pred_check
      _
    $region7: #{tpu_custom_call.1} parent=1 // pred_check_branch
      %22 = sbr.rel (0) target = $region9
    $region8: #{tpu_custom_call.1} parent=1 // pred_region
      %s24 = ssub.s32 2048, 2048
      %25 = vsyncadd [#allocation6], %s24
      %s26 = sshll.u32 [#allocation5], 4
      %s27 = int_to_ptr.vmem [resolvable:$true] %s26
      %32 = dma.hbm_to_vmem [thread:$0]  %s1, 2048, %s27, [#allocation6], 64, 64, 4
    $region9: #{tpu_custom_call.1} parent=1 // pred_fallthru
      _
    // Predicated region
    $region10: #{tpu_custom_call.1} parent=1 // pred_check
      _
    $region11: #{tpu_custom_call.1} parent=1 // pred_check_branch
      %34 = sbr.rel (0) target = $region13
    $region12: #{tpu_custom_call.1} parent=1 // pred_region
      %s36 = ssub.s32 128, 128
      %37 = vsyncadd [#allocation6], %s36
      %s39 = sshll.u32 [#allocation7], 4
      %s40 = int_to_ptr.vmem [resolvable:$true] %s39
      %42 = dma.hbm_to_vmem [thread:$0]  %s2, 128, %s40, [#allocation6]
    $region13: #{tpu_custom_call.1} parent=1 // pred_fallthru
      _
    // Predicated region
    $region14: #{tpu_custom_call.1} parent=1 // pred_check
      _
    $region15: #{tpu_custom_call.1} parent=1 // pred_check_branch
      %44 = sbr.rel (0) target = $region17
    $region16: #{tpu_custom_call.1} parent=1 // pred_region
      %45 = dma.done [#allocation3], 128
    $region17: #{tpu_custom_call.1} parent=1 // pred_fallthru
      _
    // Predicated region
    $region18: #{tpu_custom_call.1} parent=1 // pred_check
      _
    $region19: #{tpu_custom_call.1} parent=1 // pred_check_branch
      %47 = sbr.rel (0) target = $region21
    $region20: #{tpu_custom_call.1} parent=1 // pred_region
      %48 = dma.done [#allocation6], 2048
    $region21: #{tpu_custom_call.1} parent=1 // pred_fallthru
      _
    // Predicated region
    $region22: #{tpu_custom_call.1} parent=1 // pred_check
      _
    $region23: #{tpu_custom_call.1} parent=1 // pred_check_branch
      %50 = sbr.rel (0) target = $region25
    $region24: #{tpu_custom_call.1} parent=1 // pred_region
      %51 = dma.done [#allocation6], 128
    $region25: #{tpu_custom_call.1} parent=1 // pred_fallthru
      _
    %v53 = vld [vmem:[#allocation2] sm:$0xff]
    %v54 = vld [vmem:[#allocation5] sm:$0xf]
    %v55 = vld [vmem:[#allocation5 + $0x4] sm:$0xf]
    %v56 = vld [vmem:[#allocation5 + $0x8] sm:$0xf]
    %v57 = vld [vmem:[#allocation5 + $0xc] sm:$0xf]
    %v58 = vld [vmem:[#allocation5 + $0x10] sm:$0xf]
    %v59 = vld [vmem:[#allocation5 + $0x14] sm:$0xf]
    %v60 = vld [vmem:[#allocation5 + $0x18] sm:$0xf]
    %v61 = vld [vmem:[#allocation5 + $0x1c] sm:$0xf]
    %v62 = vld [vmem:[#allocation5 + $0x20] sm:$0xf]
    %v63 = vld [vmem:[#allocation5 + $0x24] sm:$0xf]
    %v64 = vld [vmem:[#allocation5 + $0x28] sm:$0xf]
    %v65 = vld [vmem:[#allocation5 + $0x2c] sm:$0xf]
    %v66 = vld [vmem:[#allocation5 + $0x30] sm:$0xf]
    %v67 = vld [vmem:[#allocation5 + $0x34] sm:$0xf]
    %v68 = vld [vmem:[#allocation5 + $0x38] sm:$0xf]
    %v69 = vld [vmem:[#allocation5 + $0x3c] sm:$0xf]
    %v70 = vld [vmem:[#allocation5 + $0x40] sm:$0xf]
    %v71 = vld [vmem:[#allocation5 + $0x44] sm:$0xf]
    %v72 = vld [vmem:[#allocation5 + $0x48] sm:$0xf]
    %v73 = vld [vmem:[#allocation5 + $0x4c] sm:$0xf]
    %v74 = vld [vmem:[#allocation5 + $0x50] sm:$0xf]
    %v75 = vld [vmem:[#allocation5 + $0x54] sm:$0xf]
    %v76 = vld [vmem:[#allocation5 + $0x58] sm:$0xf]
    %v77 = vld [vmem:[#allocation5 + $0x5c] sm:$0xf]
    %v78 = vld [vmem:[#allocation5 + $0x60] sm:$0xf]
    %v79 = vld [vmem:[#allocation5 + $0x64] sm:$0xf]
    %v80 = vld [vmem:[#allocation5 + $0x68] sm:$0xf]
    %v81 = vld [vmem:[#allocation5 + $0x6c] sm:$0xf]
    %v82 = vld [vmem:[#allocation5 + $0x70] sm:$0xf]
    %v83 = vld [vmem:[#allocation5 + $0x74] sm:$0xf]
    %v84 = vld [vmem:[#allocation5 + $0x78] sm:$0xf]
    %v85 = vld [vmem:[#allocation5 + $0x7c] sm:$0xf]
    %v86 = vld [vmem:[#allocation7] sm:$0xff]
    %v87 = vlaneseq
    %v88 = vshrl.u32 %v87, 7
    %v89 = vsub.s32 0, %v88
    %v90 = vrot.slane %v86, %v89
    %v92 = vunpack.c.l.b16 %v53
    %v93 = vunpack.c.h.b16 %v53
    %v94 = vpack.c.b16 %v92, %v92
    %v95 = vpack.c.b16 %v93, %v93
    %v130 = vunpack.c.l.b16 %v54
    %v131 = vunpack.c.l.b16 %v55
    %v132 = vunpack.c.l.b16 %v56
    %v133 = vunpack.c.l.b16 %v57
    %v134 = vunpack.c.l.b16 %v58
    %v135 = vunpack.c.l.b16 %v59
    %v136 = vunpack.c.l.b16 %v60
    %v137 = vunpack.c.l.b16 %v61
    %v138 = vunpack.c.l.b16 %v62
    %v139 = vunpack.c.l.b16 %v63
    %v140 = vunpack.c.l.b16 %v64
    %v141 = vunpack.c.l.b16 %v65
    %v142 = vunpack.c.l.b16 %v66
    %v143 = vunpack.c.l.b16 %v67
    %v144 = vunpack.c.l.b16 %v68
    %v145 = vunpack.c.l.b16 %v69
    %v146 = vunpack.c.l.b16 %v70
    %v147 = vunpack.c.l.b16 %v71
    %v148 = vunpack.c.l.b16 %v72
    %v149 = vunpack.c.l.b16 %v73
    %v150 = vunpack.c.l.b16 %v74
    %v151 = vunpack.c.l.b16 %v75
    %v152 = vunpack.c.l.b16 %v76
    %v153 = vunpack.c.l.b16 %v77
    %v154 = vunpack.c.l.b16 %v78
    %v155 = vunpack.c.l.b16 %v79
    %v156 = vunpack.c.l.b16 %v80
    %v157 = vunpack.c.l.b16 %v81
    %v158 = vunpack.c.l.b16 %v82
    %v159 = vunpack.c.l.b16 %v83
    %v160 = vunpack.c.l.b16 %v84
    %v161 = vunpack.c.l.b16 %v85
    %v162 = vpack.c.b16 %v131, %v130
    %v163 = vpack.c.b16 %v133, %v132
    %v164 = vpack.c.b16 %v135, %v134
    %v165 = vpack.c.b16 %v137, %v136
    %v166 = vpack.c.b16 %v139, %v138
    %v167 = vpack.c.b16 %v141, %v140
    %v168 = vpack.c.b16 %v143, %v142
    %v169 = vpack.c.b16 %v145, %v144
    %v170 = vpack.c.b16 %v147, %v146
    %v171 = vpack.c.b16 %v149, %v148
    %v172 = vpack.c.b16 %v151, %v150
    %v173 = vpack.c.b16 %v153, %v152
    %v174 = vpack.c.b16 %v155, %v154
    %v175 = vpack.c.b16 %v157, %v156
    %v176 = vpack.c.b16 %v159, %v158
    %v177 = vpack.c.b16 %v161, %v160
    %194 = vmatprep.subr.bf16.mxu0 0
    %195 = vmatpush1.bf16.msra.mxu0 %v162
    %196 = vmatprep.subr.bf16.mxu0 0
    %197 = vmatpush1.bf16.msra.mxu0 %v163
    %198 = vmatprep.subr.bf16.mxu0 0
    %199 = vmatpush1.bf16.msra.mxu0 %v164
    %200 = vmatprep.subr.bf16.mxu0 0
    %201 = vmatpush1.bf16.msra.mxu0 %v165
    %202 = vmatprep.subr.bf16.mxu0 0
    %203 = vmatpush1.bf16.msra.mxu0 %v166
    %204 = vmatprep.subr.bf16.mxu0 0
    %205 = vmatpush1.bf16.msra.mxu0 %v167
    %206 = vmatprep.subr.bf16.mxu0 0
    %207 = vmatpush1.bf16.msra.mxu0 %v168
    %208 = vmatprep.subr.bf16.mxu0 0
    %209 = vmatpush1.bf16.msra.mxu0 %v169
    %210 = vmatprep.subr.bf16.mxu0 0
    %211 = vmatpush1.bf16.msra.mxu0 %v170
    %212 = vmatprep.subr.bf16.mxu0 0
    %213 = vmatpush1.bf16.msra.mxu0 %v171
    %214 = vmatprep.subr.bf16.mxu0 0
    %215 = vmatpush1.bf16.msra.mxu0 %v172
    %216 = vmatprep.subr.bf16.mxu0 0
    %217 = vmatpush1.bf16.msra.mxu0 %v173
    %218 = vmatprep.subr.bf16.mxu0 0
    %219 = vmatpush1.bf16.msra.mxu0 %v174
    %220 = vmatprep.subr.bf16.mxu0 0
    %221 = vmatpush1.bf16.msra.mxu0 %v175
    %222 = vmatprep.subr.bf16.mxu0 0
    %223 = vmatpush1.bf16.msra.mxu0 %v176
    %224 = vmatprep.subr.bf16.mxu0 0
    %225 = vmatpush1.bf16.msra.mxu0 %v177
    %226 = vmatprep.mubr.bf16.mxu0 %v95
    %227 = vmatmul.mubr.bf16.gmra.mrb[0].mxu0 %v94
    %v228 = vpop.f32.mrb[0].mxu0
    %v229 = vadd.f32 %v90, %v228
    %v230 = vpop.f32.mrb[0].mxu0
    %v231 = vpop.f32.mrb[0].mxu0
    %v232 = vpop.f32.mrb[0].mxu0
    %233 = vdwg.mxu0
    %234 = vadd.xlane.f32.xlu0 %v229
    %v235 = vpop.xlane.xlu0 %234
    %v236 = vmul.f32 %v235, 0.03125
    %v237 = vlaneseq
    %v238 = vand.u32 %v237, 127
    %vm239 = vcmp.lt.s32.totalorder %v238, 32
    %v240 = vsub.f32 %v229, %v236
    %v241 = vsel %vm239, 1, 0
    %vm242 = vcmp.eq.s32.totalorder %v241, 1
    %v243 = vsel %vm242, %v240, 0.0
    %v244 = vmul.f32 %v243, %v243
    %245 = vadd.xlane.f32.xlu0 %v244
    %v246 = vpop.xlane.xlu0 %245
    %v247 = vmul.f32 %v246, 0.03125
    %v248 = vadd.f32 %v247, 1e-06
    %v249 = vrsqrt.pop %v248
    %v250 = vmul.f32 %v243, %v249
    %v251 = vlaneseq
    %v252 = vshrl.u32 %v251, 7
    %v253 = vsub.s32 1, %v252
    %v254 = vrot.slane %v86, %v253
    %v255 = vmul.f32 %v250, %v254
    %v256 = vlaneseq
    %v257 = vshrl.u32 %v256, 7
    %v258 = vsub.s32 2, %v257
    %v259 = vrot.slane %v86, %v258
    %v260 = vadd.f32 %v255, %v259
    %261 = vst [vmem:[#allocation8] sm:$0xff] %v260
    // Predicated region
    $region26: #{tpu_custom_call.1} parent=1 // pred_check
      _
    $region27: #{tpu_custom_call.1} parent=1 // pred_check_branch
      %263 = sbr.rel (0) target = $region29
    $region28: #{tpu_custom_call.1} parent=1 // pred_region
      %s265 = ssub.s32 128, 128
      %266 = vsyncadd [#allocation4], %s265
      %s268 = sshll.u32 [#allocation8], 4
      %s269 = int_to_ptr.vmem [resolvable:$true] %s268
      %271 = dma.vmem_to_hbm [thread:$0]  %s269, 128, %s3, [#allocation4]
    $region29: #{tpu_custom_call.1} parent=1 // pred_fallthru
      _
    // Predicated region
    $region30: #{tpu_custom_call.1} parent=1 // pred_check
      _
    $region31: #{tpu_custom_call.1} parent=1 // pred_check_branch
      %273 = sbr.rel (0) target = $region33
    $region32: #{tpu_custom_call.1} parent=1 // pred_region
      %274 = dma.done [#allocation4], 128
    $region33: #{tpu_custom_call.1} parent=1 // pred_fallthru
      _
    %275 = vsyncpa [#allocation3], 1
    %276 = vsyncpa [#allocation6], 1
    %277 = vsyncpa [#allocation4], 1

</llo_original>
